<compile_context>
chip_gen: v6e
topology: v6e:2x2x1
jax: 0.10.0
libtpu: 0.0.40
codegen_flags: <defaults>
</compile_context>

<pallas_src>
import jax
import jax.numpy as jnp
from jax.experimental import pallas as pl
from jax.experimental.pallas import tpu as pltpu

IMAGE_SIZE = 28
NGF = 64
IN_DIM = 1 * IMAGE_SIZE * IMAGE_SIZE   # 784
H1 = NGF                               # 64
H2 = NGF                               # 64
H3 = 16
OUT_DIM = 1
LANES = 128                            # pad every hidden width to a full vreg


def _round_up(x, m):
    return ((x + m - 1) // m) * m


def _tensorcores_per_chip():
    """v7x has 2 TensorCores per chip; v5e/v6e have 1.  Safe fallback: 1."""
    try:
        kind = jax.devices()[0].device_kind.lower()
    except Exception:
        return 1
    return 2 if any(tag in kind for tag in ("v7", "tpu7", "7x")) else 1


def _choose_batch_tile(n, batch_tile, cores):
    """Pick the batch tile size.

    f32 x tiles are double-buffered: tb=2048 -> ~12.8 MiB of x buffers, well
    inside the 32 MiB scoped VMEM limit (and v7x's 64 MiB physical VMEM).
    Don't raise the cap past ~4096 without also raising vmem_limit_bytes.
    """
    cap = _round_up(min(max(batch_tile, 128), 2048), 128)
    if cores >= 2 and n >= 4 * LANES:
        # v7x: even tile count >= 4 so each of the 2 TensorCores gets >= 2
        # pipelined grid steps (hides the next tile's x DMA behind compute)
        # and the cores stay load-balanced.
        num_tiles = max(4, 2 * pl.cdiv(pl.cdiv(n, cap), 2))
        return min(_round_up(pl.cdiv(n, num_tiles), 128), cap)
    if n > cap:
        # v5e/v6e: single TensorCore -> biggest VMEM-safe tile; extra splits
        # only add ~0.35 us per-step overhead on a DMA-bound kernel.
        return cap
    # Single tile.  x is f32 now, so 8-row sublane alignment suffices.
    return _round_up(n, 8)


def _disc_kernel(x_ref,
                 w1_ref, b1_ref,
                 w2_ref, b2_ref,
                 w3_ref, b3_ref,
                 w4_ref, b4_ref,
                 o_ref):
    """Whole 4-layer MLP per batch tile: 3 bf16 MXU matmuls + VPU ReLUs,
    a tiny bf16 transposed matmul for the 16->1 head, EUP exp for sigmoid."""
    # x arrives as f32 from HBM; cast to bf16 in-register (VPU slack) for MXU.
    x = x_ref[...].astype(jnp.bfloat16)                                # (TB, 784)

    # Layer 1: 784 -> 128 (64 real + 64 zero-padded lanes).
    h = jnp.dot(x, w1_ref[...], preferred_element_type=jnp.float32)   # (TB, 128) f32
    h = jnp.maximum(h + b1_ref[...], 0.0)

    # Layer 2: 128 -> 128 (64 real lanes).
    h = jnp.dot(h.astype(jnp.bfloat16), w2_ref[...],
                preferred_element_type=jnp.float32)
    h = jnp.maximum(h + b2_ref[...], 0.0)

    # Layer 3: 128 -> 128 (16 real lanes).
    h = jnp.dot(h.astype(jnp.bfloat16), w3_ref[...],
                preferred_element_type=jnp.float32)
    h = jnp.maximum(h + b3_ref[...], 0.0)                              # (TB, 128)

    # Layer 4 (16 -> 1): bf16 (1, 128) @ (TB, 128)^T so the logits come out
    # as a lane-major (1, TB) row — no relayout needed for the lane-dense
    # output store.  Padded lanes of w4 are zero.
    logits = jax.lax.dot_general(
        w4_ref[...], h.astype(jnp.bfloat16), (((1,), (1,)), ((), ())),
        preferred_element_type=jnp.float32)                            # (1, TB)
    logits = logits + b4_ref[0, 0]                                     # SMEM scalar

    probs = 1.0 / (1.0 + jnp.exp(-logits))                             # sigmoid (EUP)
    o_ref[...] = probs[None]                                           # (1, 1, TB)


def prepare_params(params):
    """Zero-pad every layer to 128 output lanes and cast matmul weights to
    bf16 (f32 accumulation is kept inside the kernel)."""
    (w1, b1), (w2, b2), (w3, b3), (w4, b4) = params

    def pad_to(a, rows, cols):
        r, c = a.shape
        return jnp.pad(a, ((0, rows - r), (0, cols - c)))

    w1p = pad_to(w1, IN_DIM, LANES).astype(jnp.bfloat16)   # (784, 128)
    b1p = pad_to(b1, 1, LANES)                             # (1, 128) f32
    w2p = pad_to(w2, LANES, LANES).astype(jnp.bfloat16)    # (128, 128)
    b2p = pad_to(b2, 1, LANES)
    w3p = pad_to(w3, LANES, LANES).astype(jnp.bfloat16)    # (128, 128)
    b3p = pad_to(b3, 1, LANES)
    w4p = pad_to(w4.T, 1, LANES).astype(jnp.bfloat16)      # row vector (1, 128) bf16
    b4p = b4.reshape(1, 1)                                 # (1, 1) f32, lives in SMEM
    return (w1p, b1p, w2p, b2p, w3p, b3p, w4p, b4p)


def discriminator_forward(x, params, *, batch_tile=2048):
    """x: (N, 784) float32. Returns (N, 1) float32 in [0, 1]."""
    n = x.shape[0]
    assert x.shape[1] == IN_DIM
    x = x.astype(jnp.float32)   # no standalone bf16 cast: kernel casts per tile

    w1p, b1p, w2p, b2p, w3p, b3p, w4p, b4p = prepare_params(params)

    cores = _tensorcores_per_chip()
    tb = _choose_batch_tile(n, batch_tile, cores)
    num_tiles = pl.cdiv(n, tb)

    full = lambda a: pl.BlockSpec(a.shape, lambda i: (0,) * a.ndim)

    out = pl.pallas_call(
        _disc_kernel,
        out_shape=jax.ShapeDtypeStruct((num_tiles, 1, tb), jnp.float32),
        grid_spec=pltpu.PrefetchScalarGridSpec(
            num_scalar_prefetch=0,
            grid=(num_tiles,),
            in_specs=[
                pl.BlockSpec((tb, IN_DIM), lambda i: (i, 0)),   # batch-tiled f32 x
                full(w1p), full(b1p),                           # resident weights
                full(w2p), full(b2p),
                full(w3p), full(b3p),
                full(w4p),
                pl.BlockSpec(memory_space=pltpu.MemorySpace.SMEM),   # b4 scalar
            ],
            # Lane-dense output slab: last dim = tb (multiple of 128 for real
            # batches) -> unmasked full-vreg stores.
            out_specs=pl.BlockSpec((1, 1, tb), lambda i: (i, 0, 0)),
        ),
        compiler_params=pltpu.CompilerParams(
            dimension_semantics=("parallel",),
            vmem_limit_bytes=32 * 1024 * 1024),
    )(x, w1p, b1p, w2p, b2p, w3p, b3p, w4p, b4p)

    # (num_tiles, 1, tb) -> (N, 1); ragged last-tile rows (undefined padded
    # input rows run through the MLP) are dropped here — this slice is part of
    # the kernel's contract.
    return out.reshape(num_tiles * tb)[:n].reshape(n, 1)


def init_params(key):
    """Deterministic init mimicking torch.nn.Linear (U[-1/sqrt(fan_in), +]).
    Weights stored as (in, out), so y = x @ W + b == PyTorch x @ W.T + b."""
    dims = [(IN_DIM, H1), (H1, H2), (H2, H3), (H3, OUT_DIM)]
    params = []
    for (fan_in, fan_out) in dims:
        key, kw, kb = jax.random.split(key, 3)
        bound = 1.0 / (fan_in ** 0.5)
        w = jax.random.uniform(kw, (fan_in, fan_out), jnp.float32, -bound, bound)
        b = jax.random.uniform(kb, (1, fan_out), jnp.float32, -bound, bound)
        params.append((w, b))
    return params


def discriminator_reference(x, params):
    """Plain-JAX reference of the PyTorch forward, mirroring the kernel's
    mixed-precision recipe (bf16 matmul inputs, f32 accumulation).  It differs
    from the pure-f32 module only by bf16 rounding of matmul inputs."""
    (w1, b1), (w2, b2), (w3, b3), (w4, b4) = params
    hi = jax.lax.Precision.HIGHEST
    bf = lambda a: a.astype(jnp.bfloat16).astype(jnp.float32)
    h = jnp.maximum(jnp.dot(bf(x), bf(w1), precision=hi) + b1, 0.0)
    h = jnp.maximum(jnp.dot(bf(h), bf(w2), precision=hi) + b2, 0.0)
    h = jnp.maximum(jnp.dot(bf(h), bf(w3), precision=hi) + b3, 0.0)
    logits = jnp.dot(bf(h), bf(w4), precision=hi) + b4
    return jax.nn.sigmoid(logits)


if __name__ == "__main__":
    key = jax.random.PRNGKey(0)
    kp, kx1, kx2 = jax.random.split(key, 3)

    params = init_params(kp)

    # Small batch: single tile.
    x_small = jax.random.normal(kx1, (8, IN_DIM), dtype=jnp.float32)
    out_small = jax.block_until_ready(discriminator_forward(x_small, params))
    ref_small = discriminator_reference(x_small, params)
    assert out_small.shape == (8, 1), out_small.shape
    assert jnp.allclose(out_small, ref_small, atol=1e-3, rtol=1e-3), (
        float(jnp.max(jnp.abs(out_small - ref_small))))

    # Larger batch: exercises grid > 1, the ragged (padded) last tile, and the
    # lane-dense output un-flattening.
    n2 = 384
    x_big = jax.random.normal(kx2, (n2, IN_DIM), dtype=jnp.float32)
    out_big = jax.block_until_ready(
        discriminator_forward(x_big, params, batch_tile=256))
    ref_big = discriminator_reference(x_big, params)
    assert out_big.shape == (n2, 1), out_big.shape
    assert jnp.allclose(out_big, ref_big, atol=1e-3, rtol=1e-3), (
        float(jnp.max(jnp.abs(out_big - ref_big))))

    print("KERNEL_OK")
</pallas_src>

<mosaic_0001>
module attributes {stable_mosaic.version = 11 : i64} {
  func.func @_disc_kernel(%arg0: i32, %arg1: memref<8x784xf32, #tpu.memory_space<vmem>>, %arg2: memref<784x128xbf16, #tpu.memory_space<vmem>>, %arg3: memref<1x128xf32, #tpu.memory_space<vmem>>, %arg4: memref<128x128xbf16, #tpu.memory_space<vmem>>, %arg5: memref<1x128xf32, #tpu.memory_space<vmem>>, %arg6: memref<128x128xbf16, #tpu.memory_space<vmem>>, %arg7: memref<1x128xf32, #tpu.memory_space<vmem>>, %arg8: memref<1x128xbf16, #tpu.memory_space<vmem>>, %arg9: memref<1x1xf32, #tpu.memory_space<smem>>, %arg10: memref<1x1x8xf32, #tpu.memory_space<vmem>>) attributes {dimension_semantics = [#tpu.dimension_semantics<parallel>], iteration_bounds = array<i64: 1>, scalar_prefetch = 0 : i64, scratch_operands = 0 : i64, tpu.core_type = #tpu.core_type<tc>, window_params = [{transform_indices = @transform_0, window_bounds = array<i64: 8, 784>}, {pipeline_mode = #tpu.pipeline_mode<synchronous>, transform_indices = @transform_1, window_bounds = array<i64: 784, 128>}, {pipeline_mode = #tpu.pipeline_mode<synchronous>, transform_indices = @transform_2, window_bounds = array<i64: 1, 128>}, {pipeline_mode = #tpu.pipeline_mode<synchronous>, transform_indices = @transform_3, window_bounds = array<i64: 128, 128>}, {pipeline_mode = #tpu.pipeline_mode<synchronous>, transform_indices = @transform_4, window_bounds = array<i64: 1, 128>}, {pipeline_mode = #tpu.pipeline_mode<synchronous>, transform_indices = @transform_5, window_bounds = array<i64: 128, 128>}, {pipeline_mode = #tpu.pipeline_mode<synchronous>, transform_indices = @transform_6, window_bounds = array<i64: 1, 128>}, {pipeline_mode = #tpu.pipeline_mode<synchronous>, transform_indices = @transform_7, window_bounds = array<i64: 1, 128>}, {transform_indices = @transform_8, window_bounds = array<i64: 1, 1>}, {transform_indices = @transform_9, window_bounds = array<i64: 1, 1, 8>}]} {
    %c0 = arith.constant 0 : index
    %c0_0 = arith.constant 0 : index
    %0 = vector.load %arg1[%c0, %c0_0] : memref<8x784xf32, #tpu.memory_space<vmem>>, vector<8x784xf32>
    %1 = arith.truncf %0 : vector<8x784xf32> to vector<8x784xbf16>
    %c0_1 = arith.constant 0 : index
    %c0_2 = arith.constant 0 : index
    %2 = vector.load %arg2[%c0_1, %c0_2] : memref<784x128xbf16, #tpu.memory_space<vmem>>, vector<784x128xbf16>
    %cst = arith.constant dense<0.000000e+00> : vector<8x128xf32>
    %3 = tpu.matmul %1, %2, %cst {dimension_numbers = #tpu.dot_dimension_numbers<[1], [0], [0], [1], [0, 0, 1, 1], [], []>} : vector<8x784xbf16>, vector<784x128xbf16>, vector<8x128xf32> -> vector<8x128xf32>
    %c0_3 = arith.constant 0 : index
    %c0_4 = arith.constant 0 : index
    %4 = vector.load %arg3[%c0_3, %c0_4] : memref<1x128xf32, #tpu.memory_space<vmem>>, vector<1x128xf32>
    %5 = vector.broadcast %4 : vector<1x128xf32> to vector<8x128xf32>
    %6 = arith.addf %3, %5 : vector<8x128xf32>
    %cst_5 = arith.constant 0.000000e+00 : f32
    %7 = vector.broadcast %cst_5 : f32 to vector<8x128xf32>
    %8 = arith.maximumf %6, %7 : vector<8x128xf32>
    %9 = arith.truncf %8 : vector<8x128xf32> to vector<8x128xbf16>
    %c0_6 = arith.constant 0 : index
    %c0_7 = arith.constant 0 : index
    %10 = vector.load %arg4[%c0_6, %c0_7] : memref<128x128xbf16, #tpu.memory_space<vmem>>, vector<128x128xbf16>
    %cst_8 = arith.constant dense<0.000000e+00> : vector<8x128xf32>
    %11 = tpu.matmul %9, %10, %cst_8 {dimension_numbers = #tpu.dot_dimension_numbers<[1], [0], [0], [1], [0, 0, 1, 1], [], []>} : vector<8x128xbf16>, vector<128x128xbf16>, vector<8x128xf32> -> vector<8x128xf32>
    %c0_9 = arith.constant 0 : index
    %c0_10 = arith.constant 0 : index
    %12 = vector.load %arg5[%c0_9, %c0_10] : memref<1x128xf32, #tpu.memory_space<vmem>>, vector<1x128xf32>
    %13 = vector.broadcast %12 : vector<1x128xf32> to vector<8x128xf32>
    %14 = arith.addf %11, %13 : vector<8x128xf32>
    %cst_11 = arith.constant 0.000000e+00 : f32
    %15 = vector.broadcast %cst_11 : f32 to vector<8x128xf32>
    %16 = arith.maximumf %14, %15 : vector<8x128xf32>
    %17 = arith.truncf %16 : vector<8x128xf32> to vector<8x128xbf16>
    %c0_12 = arith.constant 0 : index
    %c0_13 = arith.constant 0 : index
    %18 = vector.load %arg6[%c0_12, %c0_13] : memref<128x128xbf16, #tpu.memory_space<vmem>>, vector<128x128xbf16>
    %cst_14 = arith.constant dense<0.000000e+00> : vector<8x128xf32>
    %19 = tpu.matmul %17, %18, %cst_14 {dimension_numbers = #tpu.dot_dimension_numbers<[1], [0], [0], [1], [0, 0, 1, 1], [], []>} : vector<8x128xbf16>, vector<128x128xbf16>, vector<8x128xf32> -> vector<8x128xf32>
    %c0_15 = arith.constant 0 : index
    %c0_16 = arith.constant 0 : index
    %20 = vector.load %arg7[%c0_15, %c0_16] : memref<1x128xf32, #tpu.memory_space<vmem>>, vector<1x128xf32>
    %21 = vector.broadcast %20 : vector<1x128xf32> to vector<8x128xf32>
    %22 = arith.addf %19, %21 : vector<8x128xf32>
    %cst_17 = arith.constant 0.000000e+00 : f32
    %23 = vector.broadcast %cst_17 : f32 to vector<8x128xf32>
    %24 = arith.maximumf %22, %23 : vector<8x128xf32>
    %c0_18 = arith.constant 0 : index
    %c0_19 = arith.constant 0 : index
    %25 = vector.load %arg8[%c0_18, %c0_19] : memref<1x128xbf16, #tpu.memory_space<vmem>>, vector<1x128xbf16>
    %26 = arith.truncf %24 : vector<8x128xf32> to vector<8x128xbf16>
    %cst_20 = arith.constant dense<0.000000e+00> : vector<1x8xf32>
    %27 = tpu.matmul %25, %26, %cst_20 {dimension_numbers = #tpu.dot_dimension_numbers<[1], [1], [0], [0], [0, 0, 1, 0], [], []>} : vector<1x128xbf16>, vector<8x128xbf16>, vector<1x8xf32> -> vector<1x8xf32>
    %c0_21 = arith.constant 0 : index
    %c0_22 = arith.constant 0 : index
    %28 = memref.load %arg9[%c0_21, %c0_22] : memref<1x1xf32, #tpu.memory_space<smem>>
    %29 = vector.broadcast %28 : f32 to vector<1x8xf32>
    %30 = arith.addf %27, %29 : vector<1x8xf32>
    %cst_23 = arith.constant 0.000000e+00 : f32
    %31 = vector.broadcast %cst_23 : f32 to vector<1x8xf32>
    %32 = arith.subf %31, %30 : vector<1x8xf32>
    %33 = math.exp %32 : vector<1x8xf32>
    %cst_24 = arith.constant 1.000000e+00 : f32
    %34 = vector.broadcast %cst_24 : f32 to vector<1x8xf32>
    %35 = arith.addf %34, %33 : vector<1x8xf32>
    %cst_25 = arith.constant 1.000000e+00 : f32
    %36 = vector.broadcast %cst_25 : f32 to vector<1x8xf32>
    %37 = arith.divf %36, %35 : vector<1x8xf32>
    %38 = vector.shape_cast %37 : vector<1x8xf32> to vector<1x1x8xf32>
    %c0_26 = arith.constant 0 : index
    %c0_27 = arith.constant 0 : index
    %c0_28 = arith.constant 0 : index
    %39 = vector.load %arg10[%c0_26, %c0_27, %c0_28] : memref<1x1x8xf32, #tpu.memory_space<vmem>>, vector<1x1x8xf32>
    tpu.vector_store %arg10[%c0_26, %c0_27, %c0_28], %38 {strides = array<i32>} : memref<1x1x8xf32, #tpu.memory_space<vmem>>, vector<1x1x8xf32>,
    return
  }
  func.func @transform_0(%arg0: i32) -> (i32, i32) {
    %c0_i32 = arith.constant 0 : i32
    %c0_i32_0 = arith.constant 0 : i32
    return %arg0, %c0_i32 : i32, i32
  }
  func.func @transform_1(%arg0: i32) -> (i32, i32) {
    %c0_i32 = arith.constant 0 : i32
    %c0_i32_0 = arith.constant 0 : i32
    %c0_i32_1 = arith.constant 0 : i32
    return %c0_i32, %c0_i32_0 : i32, i32
  }
  func.func @transform_2(%arg0: i32) -> (i32, i32) {
    %c0_i32 = arith.constant 0 : i32
    %c0_i32_0 = arith.constant 0 : i32
    %c0_i32_1 = arith.constant 0 : i32
    return %c0_i32, %c0_i32_0 : i32, i32
  }
  func.func @transform_3(%arg0: i32) -> (i32, i32) {
    %c0_i32 = arith.constant 0 : i32
    %c0_i32_0 = arith.constant 0 : i32
    %c0_i32_1 = arith.constant 0 : i32
    return %c0_i32, %c0_i32_0 : i32, i32
  }
  func.func @transform_4(%arg0: i32) -> (i32, i32) {
    %c0_i32 = arith.constant 0 : i32
    %c0_i32_0 = arith.constant 0 : i32
    %c0_i32_1 = arith.constant 0 : i32
    return %c0_i32, %c0_i32_0 : i32, i32
  }
  func.func @transform_5(%arg0: i32) -> (i32, i32) {
    %c0_i32 = arith.constant 0 : i32
    %c0_i32_0 = arith.constant 0 : i32
    %c0_i32_1 = arith.constant 0 : i32
    return %c0_i32, %c0_i32_0 : i32, i32
  }
  func.func @transform_6(%arg0: i32) -> (i32, i32) {
    %c0_i32 = arith.constant 0 : i32
    %c0_i32_0 = arith.constant 0 : i32
    %c0_i32_1 = arith.constant 0 : i32
    return %c0_i32, %c0_i32_0 : i32, i32
  }
  func.func @transform_7(%arg0: i32) -> (i32, i32) {
    %c0_i32 = arith.constant 0 : i32
    %c0_i32_0 = arith.constant 0 : i32
    %c0_i32_1 = arith.constant 0 : i32
    return %c0_i32, %c0_i32_0 : i32, i32
  }
  func.func @transform_8(%arg0: i32) -> (i32, i32) {
    %c0_i32 = arith.constant 0 : i32
    %c0_i32_0 = arith.constant 0 : i32
    %c0_i32_1 = arith.constant 0 : i32
    return %c0_i32, %c0_i32_0 : i32, i32
  }
  func.func @transform_9(%arg0: i32) -> (i32, i32, i32) {
    %c0_i32 = arith.constant 0 : i32
    %c0_i32_0 = arith.constant 0 : i32
    %c0_i32_1 = arith.constant 0 : i32
    return %arg0, %c0_i32, %c0_i32_0 : i32, i32, i32
  }
}

</mosaic_0001>

<llo_original>
// kernel: tpu_custom_call.1
$region0: #{tpu_custom_call.1}
  #allocation0 [shape = 'u32[]', space=smem, size = 0x4, offset = 0x4, fixed_abs, tag = 'smem constant byte address 0x4 - core index']
  #allocation1 [shape = 'u32[144,128]{1,0:T(1,128)}', space=vmem, size = 0x12000, scoped, tag = 'internal scratch']
  #allocation2 [shape = 'f32[1,1]{1,0:T(1,128)S(6)}', space=smem, size = 0x200, scoped, tag = 'scoped memory for tpu_custom_call.1']
  %s0 = inlined_call_operand.hbm [shape: f32[8,784], index: 0, kind: input, shape index: {}]
  %s1 = inlined_call_operand.hbm [shape: bf16[784,128], index: 1, kind: input, shape index: {}]
  %s2 = inlined_call_operand.vmem [shape: f32[1,128], index: 2, kind: input, shape index: {}]
  %s3 = inlined_call_operand.hbm [shape: bf16[128,128], index: 3, kind: input, shape index: {}]
  %s4 = inlined_call_operand.vmem [shape: f32[1,128], index: 4, kind: input, shape index: {}]
  %s5 = inlined_call_operand.hbm [shape: bf16[128,128], index: 5, kind: input, shape index: {}]
  %s6 = inlined_call_operand.vmem [shape: f32[1,128], index: 6, kind: input, shape index: {}]
  %s7 = inlined_call_operand.vmem [shape: bf16[1,128], index: 7, kind: input, shape index: {}]
  %s8 = inlined_call_operand.<no memory space> [shape: f32[1,1], index: 8, kind: input, shape index: {}]
  %s9 = inlined_call_operand.hbm [shape: f32[1,1,8], index: 9, kind: output, shape index: {}]
  %s10 = sld [smem:[#allocation0]]
  $region62: #{tpu_custom_call.1} parent=0
    _
  %s12 = ssub.s32 1, %s10
  %s13 = scalar_select 0, %s12, %s10
  %14 = sst [smem:[#allocation2]] %s8
  $region1: #{tpu_custom_call.1} parent=0
    #allocation3 [shape = 'u8[28672]{0}', space=vmem, size = 0x7000, scoped, tag = 'input window, operand 0, single buffered']
    #allocation4 [shape = 's32[1]{0}', space=sflag, size = 0x4, scoped, tag = 'scoped memory for tpu_custom_call.1']
    #allocation5 [shape = 's32[1]{0}', space=sflag, size = 0x4, scoped, tag = 'scoped memory for tpu_custom_call.1']
    #allocation6 [shape = 'u8[200704]{0}', space=vmem, size = 0x31000, scoped, tag = 'input window, operand 1, single buffered']
    #allocation7 [shape = 's32[1]{0}', space=sflag, size = 0x4, scoped, tag = 'scoped memory for tpu_custom_call.1']
    #allocation8 [shape = 'u8[32768]{0}', space=vmem, size = 0x8000, scoped, tag = 'input window, operand 3, single buffered']
    #allocation9 [shape = 'u8[32768]{0}', space=vmem, size = 0x8000, scoped, tag = 'input window, operand 5, single buffered']
    #allocation10 [shape = 's32[1]{0}', space=sflag, size = 0x4, scoped, tag = 'scoped memory for tpu_custom_call.1']
    #allocation11 [shape = 'u8[512]{0}', space=vmem, size = 0x400, scoped, tag = 'output window, operand 0, single buffered']
    %15 = vsyncpa [#allocation4], 0
    %16 = vsyncpa [#allocation7], 0
    %17 = vsyncpa [#allocation10], 0
    %18 = vsyncpa [#allocation5], 0
    // Predicated region
    $region2: #{tpu_custom_call.1} parent=1 // pred_check
      _
    $region3: #{tpu_custom_call.1} parent=1 // pred_check_branch
      %20 = sbr.rel (0) target = $region5
    $region4: #{tpu_custom_call.1} parent=1 // pred_region
      %s22 = ssub.s32 896, 896
      %23 = vsyncadd [#allocation4], %s22
      %s25 = sshll.u32 [#allocation3], 4
      %s26 = int_to_ptr.vmem [resolvable:$true] %s25
      %28 = dma.hbm_to_vmem [thread:$0]  %s0, 896, %s26, [#allocation4]
    $region5: #{tpu_custom_call.1} parent=1 // pred_fallthru
      _
    // Predicated region
    $region6: #{tpu_custom_call.1} parent=1 // pred_check
      _
    $region7: #{tpu_custom_call.1} parent=1 // pred_check_branch
      %30 = sbr.rel (0) target = $region9
    $region8: #{tpu_custom_call.1} parent=1 // pred_region
      %s32 = ssub.s32 6272, 6272
      %33 = vsyncadd [#allocation7], %s32
      %s34 = sshll.u32 [#allocation6], 4
      %s35 = int_to_ptr.vmem [resolvable:$true] %s34
      %40 = dma.hbm_to_vmem [thread:$0]  %s1, 6272, %s35, [#allocation7], 64, 64, 4
    $region9: #{tpu_custom_call.1} parent=1 // pred_fallthru
      _
    // Predicated region
    $region10: #{tpu_custom_call.1} parent=1 // pred_check
      _
    $region11: #{tpu_custom_call.1} parent=1 // pred_check_branch
      %42 = sbr.rel (0) target = $region13
    $region12: #{tpu_custom_call.1} parent=1 // pred_region
      _
    $region13: #{tpu_custom_call.1} parent=1 // pred_fallthru
      _
    // Predicated region
    $region14: #{tpu_custom_call.1} parent=1 // pred_check
      _
    $region15: #{tpu_custom_call.1} parent=1 // pred_check_branch
      %44 = sbr.rel (0) target = $region17
    $region16: #{tpu_custom_call.1} parent=1 // pred_region
      %s46 = ssub.s32 1024, 1024
      %47 = vsyncadd [#allocation7], %s46
      %s48 = sshll.u32 [#allocation8], 4
      %s49 = int_to_ptr.vmem [resolvable:$true] %s48
      %54 = dma.hbm_to_vmem [thread:$0]  %s3, 1024, %s49, [#allocation7], 64, 64, 4
    $region17: #{tpu_custom_call.1} parent=1 // pred_fallthru
      _
    // Predicated region
    $region18: #{tpu_custom_call.1} parent=1 // pred_check
      _
    $region19: #{tpu_custom_call.1} parent=1 // pred_check_branch
      %56 = sbr.rel (0) target = $region21
    $region20: #{tpu_custom_call.1} parent=1 // pred_region
      _
    $region21: #{tpu_custom_call.1} parent=1 // pred_fallthru
      _
    // Predicated region
    $region22: #{tpu_custom_call.1} parent=1 // pred_check
      _
    $region23: #{tpu_custom_call.1} parent=1 // pred_check_branch
      %58 = sbr.rel (0) target = $region25
    $region24: #{tpu_custom_call.1} parent=1 // pred_region
      %s60 = ssub.s32 1024, 1024
      %61 = vsyncadd [#allocation10], %s60
      %s62 = sshll.u32 [#allocation9], 4
      %s63 = int_to_ptr.vmem [resolvable:$true] %s62
      %68 = dma.hbm_to_vmem [thread:$0]  %s5, 1024, %s63, [#allocation10], 64, 64, 4
    $region25: #{tpu_custom_call.1} parent=1 // pred_fallthru
      _
    // Predicated region
    $region26: #{tpu_custom_call.1} parent=1 // pred_check
      _
    $region27: #{tpu_custom_call.1} parent=1 // pred_check_branch
      %70 = sbr.rel (0) target = $region29
    $region28: #{tpu_custom_call.1} parent=1 // pred_region
      _
    $region29: #{tpu_custom_call.1} parent=1 // pred_fallthru
      _
    // Predicated region
    $region30: #{tpu_custom_call.1} parent=1 // pred_check
      _
    $region31: #{tpu_custom_call.1} parent=1 // pred_check_branch
      %72 = sbr.rel (0) target = $region33
    $region32: #{tpu_custom_call.1} parent=1 // pred_region
      _
    $region33: #{tpu_custom_call.1} parent=1 // pred_fallthru
      _
    // Predicated region
    $region34: #{tpu_custom_call.1} parent=1 // pred_check
      _
    $region35: #{tpu_custom_call.1} parent=1 // pred_check_branch
      %74 = sbr.rel (0) target = $region37
    $region36: #{tpu_custom_call.1} parent=1 // pred_region
      _
    $region37: #{tpu_custom_call.1} parent=1 // pred_fallthru
      _
    // Predicated region
    $region38: #{tpu_custom_call.1} parent=1 // pred_check
      _
    $region39: #{tpu_custom_call.1} parent=1 // pred_check_branch
      %76 = sbr.rel (0) target = $region41
    $region40: #{tpu_custom_call.1} parent=1 // pred_region
      %77 = dma.done [#allocation4], 896
    $region41: #{tpu_custom_call.1} parent=1 // pred_fallthru
      _
    // Predicated region
    $region42: #{tpu_custom_call.1} parent=1 // pred_check
      _
    $region43: #{tpu_custom_call.1} parent=1 // pred_check_branch
      %79 = sbr.rel (0) target = $region45
    $region44: #{tpu_custom_call.1} parent=1 // pred_region
      %80 = dma.done [#allocation7], 6272
    $region45: #{tpu_custom_call.1} parent=1 // pred_fallthru
      _
    // Predicated region
    $region46: #{tpu_custom_call.1} parent=1 // pred_check
      _
    $region47: #{tpu_custom_call.1} parent=1 // pred_check_branch
      %82 = sbr.rel (0) target = $region49
    $region48: #{tpu_custom_call.1} parent=1 // pred_region
      %83 = dma.done [#allocation7], 1024
    $region49: #{tpu_custom_call.1} parent=1 // pred_fallthru
      _
    // Predicated region
    $region50: #{tpu_custom_call.1} parent=1 // pred_check
      _
    $region51: #{tpu_custom_call.1} parent=1 // pred_check_branch
      %85 = sbr.rel (0) target = $region53
    $region52: #{tpu_custom_call.1} parent=1 // pred_region
      %86 = dma.done [#allocation10], 1024
    $region53: #{tpu_custom_call.1} parent=1 // pred_fallthru
      _
    %v88 = vld [vmem:[#allocation3] sm:$0xff]
    %v89 = vld [vmem:[#allocation3 + $0x8] sm:$0xff]
    %v90 = vld [vmem:[#allocation3 + $0x10] sm:$0xff]
    %v91 = vld [vmem:[#allocation3 + $0x18] sm:$0xff]
    %v92 = vld [vmem:[#allocation3 + $0x20] sm:$0xff]
    %v93 = vld [vmem:[#allocation3 + $0x28] sm:$0xff]
    %v94 = vld [vmem:[#allocation3 + $0x30] sm:$0xff]
    %v95 = vpack.c.bf16 %v88, %v88
    %v96 = vpack.c.bf16 %v89, %v89
    %v97 = vpack.c.bf16 %v90, %v90
    %v98 = vpack.c.bf16 %v91, %v91
    %v99 = vpack.c.bf16 %v92, %v92
    %v100 = vpack.c.bf16 %v93, %v93
    %v101 = vpack.c.bf16 %v94, %v94
    %v102 = vld [vmem:[#allocation6] sm:$0xf]
    %v103 = vld [vmem:[#allocation6 + $0x4] sm:$0xf]
    %v104 = vld [vmem:[#allocation6 + $0x8] sm:$0xf]
    %v105 = vld [vmem:[#allocation6 + $0xc] sm:$0xf]
    %v106 = vld [vmem:[#allocation6 + $0x10] sm:$0xf]
    %v107 = vld [vmem:[#allocation6 + $0x14] sm:$0xf]
    %v108 = vld [vmem:[#allocation6 + $0x18] sm:$0xf]
    %v109 = vld [vmem:[#allocation6 + $0x1c] sm:$0xf]
    %v110 = vld [vmem:[#allocation6 + $0x20] sm:$0xf]
    %v111 = vld [vmem:[#allocation6 + $0x24] sm:$0xf]
    %v112 = vld [vmem:[#allocation6 + $0x28] sm:$0xf]
    %v113 = vld [vmem:[#allocation6 + $0x2c] sm:$0xf]
    %v114 = vld [vmem:[#allocation6 + $0x30] sm:$0xf]
    %v115 = vld [vmem:[#allocation6 + $0x34] sm:$0xf]
    %v116 = vld [vmem:[#allocation6 + $0x38] sm:$0xf]
    %v117 = vld [vmem:[#allocation6 + $0x3c] sm:$0xf]
    %v118 = vld [vmem:[#allocation6 + $0x40] sm:$0xf]
    %v119 = vld [vmem:[#allocation6 + $0x44] sm:$0xf]
    %v120 = vld [vmem:[#allocation6 + $0x48] sm:$0xf]
    %v121 = vld [vmem:[#allocation6 + $0x4c] sm:$0xf]
    %v122 = vld [vmem:[#allocation6 + $0x50] sm:$0xf]
    %v123 = vld [vmem:[#allocation6 + $0x54] sm:$0xf]
    %v124 = vld [vmem:[#allocation6 + $0x58] sm:$0xf]
    %v125 = vld [vmem:[#allocation6 + $0x5c] sm:$0xf]
    %v126 = vld [vmem:[#allocation6 + $0x60] sm:$0xf]
    %v127 = vld [vmem:[#allocation6 + $0x64] sm:$0xf]
    %v128 = vld [vmem:[#allocation6 + $0x68] sm:$0xf]
    %v129 = vld [vmem:[#allocation6 + $0x6c] sm:$0xf]
    %v130 = vld [vmem:[#allocation6 + $0x70] sm:$0xf]
    %v131 = vld [vmem:[#allocation6 + $0x74] sm:$0xf]
    %v132 = vld [vmem:[#allocation6 + $0x78] sm:$0xf]
    %v133 = vld [vmem:[#allocation6 + $0x7c] sm:$0xf]
    %v134 = vld [vmem:[#allocation6 + $0x80] sm:$0xf]
    %v135 = vld [vmem:[#allocation6 + $0x84] sm:$0xf]
    %v136 = vld [vmem:[#allocation6 + $0x88] sm:$0xf]
    %v137 = vld [vmem:[#allocation6 + $0x8c] sm:$0xf]
    %v138 = vld [vmem:[#allocation6 + $0x90] sm:$0xf]
    %v139 = vld [vmem:[#allocation6 + $0x94] sm:$0xf]
    %v140 = vld [vmem:[#allocation6 + $0x98] sm:$0xf]
    %v141 = vld [vmem:[#allocation6 + $0x9c] sm:$0xf]
    %v142 = vld [vmem:[#allocation6 + $0xa0] sm:$0xf]
    %v143 = vld [vmem:[#allocation6 + $0xa4] sm:$0xf]
    %v144 = vld [vmem:[#allocation6 + $0xa8] sm:$0xf]
    %v145 = vld [vmem:[#allocation6 + $0xac] sm:$0xf]
    %v146 = vld [vmem:[#allocation6 + $0xb0] sm:$0xf]
    %v147 = vld [vmem:[#allocation6 + $0xb4] sm:$0xf]
    %v148 = vld [vmem:[#allocation6 + $0xb8] sm:$0xf]
    %v149 = vld [vmem:[#allocation6 + $0xbc] sm:$0xf]
    %v150 = vld [vmem:[#allocation6 + $0xc0] sm:$0xf]
    %v151 = vld [vmem:[#allocation6 + $0xc4] sm:$0xf]
    %v152 = vld [vmem:[#allocation6 + $0xc8] sm:$0xf]
    %v153 = vld [vmem:[#allocation6 + $0xcc] sm:$0xf]
    %v154 = vld [vmem:[#allocation6 + $0xd0] sm:$0xf]
    %v155 = vld [vmem:[#allocation6 + $0xd4] sm:$0xf]
    %v156 = vld [vmem:[#allocation6 + $0xd8] sm:$0xf]
    %v157 = vld [vmem:[#allocation6 + $0xdc] sm:$0xf]
    %v158 = vld [vmem:[#allocation6 + $0xe0] sm:$0xf]
    %v159 = vld [vmem:[#allocation6 + $0xe4] sm:$0xf]
    %v160 = vld [vmem:[#allocation6 + $0xe8] sm:$0xf]
    %v161 = vld [vmem:[#allocation6 + $0xec] sm:$0xf]
    %v162 = vld [vmem:[#allocation6 + $0xf0] sm:$0xf]
    %v163 = vld [vmem:[#allocation6 + $0xf4] sm:$0xf]
    %v164 = vld [vmem:[#allocation6 + $0xf8] sm:$0xf]
    %v165 = vld [vmem:[#allocation6 + $0xfc] sm:$0xf]
    %v166 = vld [vmem:[#allocation6 + $0x100] sm:$0xf]
    %v167 = vld [vmem:[#allocation6 + $0x104] sm:$0xf]
    %v168 = vld [vmem:[#allocation6 + $0x108] sm:$0xf]
    %v169 = vld [vmem:[#allocation6 + $0x10c] sm:$0xf]
    %v170 = vld [vmem:[#allocation6 + $0x110] sm:$0xf]
    %v171 = vld [vmem:[#allocation6 + $0x114] sm:$0xf]
    %v172 = vld [vmem:[#allocation6 + $0x118] sm:$0xf]
    %v173 = vld [vmem:[#allocation6 + $0x11c] sm:$0xf]
    %v174 = vld [vmem:[#allocation6 + $0x120] sm:$0xf]
    %v175 = vld [vmem:[#allocation6 + $0x124] sm:$0xf]
    %v176 = vld [vmem:[#allocation6 + $0x128] sm:$0xf]
    %v177 = vld [vmem:[#allocation6 + $0x12c] sm:$0xf]
    %v178 = vld [vmem:[#allocation6 + $0x130] sm:$0xf]
    %v179 = vld [vmem:[#allocation6 + $0x134] sm:$0xf]
    %v180 = vld [vmem:[#allocation6 + $0x138] sm:$0xf]
    %v181 = vld [vmem:[#allocation6 + $0x13c] sm:$0xf]
    %v182 = vld [vmem:[#allocation6 + $0x140] sm:$0xf]
    %v183 = vld [vmem:[#allocation6 + $0x144] sm:$0xf]
    %v184 = vld [vmem:[#allocation6 + $0x148] sm:$0xf]
    %v185 = vld [vmem:[#allocation6 + $0x14c] sm:$0xf]
    %v186 = vld [vmem:[#allocation6 + $0x150] sm:$0xf]
    %v187 = vld [vmem:[#allocation6 + $0x154] sm:$0xf]
    %v188 = vld [vmem:[#allocation6 + $0x158] sm:$0xf]
    %v189 = vld [vmem:[#allocation6 + $0x15c] sm:$0xf]
    %v190 = vld [vmem:[#allocation6 + $0x160] sm:$0xf]
    %v191 = vld [vmem:[#allocation6 + $0x164] sm:$0xf]
    %v192 = vld [vmem:[#allocation6 + $0x168] sm:$0xf]
    %v193 = vld [vmem:[#allocation6 + $0x16c] sm:$0xf]
    %v194 = vld [vmem:[#allocation6 + $0x170] sm:$0xf]
    %v195 = vld [vmem:[#allocation6 + $0x174] sm:$0xf]
    %v196 = vld [vmem:[#allocation6 + $0x178] sm:$0xf]
    %v197 = vld [vmem:[#allocation6 + $0x17c] sm:$0xf]
    %v198 = vld [vmem:[#allocation6 + $0x180] sm:$0xf]
    %v199 = vld [vmem:[#allocation6 + $0x184] sm:$0xf]
    %v200 = vld [vmem:[%s2] sm:$0x1]
    %v202 = vlaneseq
    %v203 = vshrl.u32 %v202, 7
    %v204 = vsub.s32 0, %v203
    %v205 = vrot.slane %v200, %v204
    %v305 = vunpack.c.l.b16 %v102
    %v306 = vunpack.c.l.b16 %v103
    %v307 = vunpack.c.l.b16 %v104
    %v308 = vunpack.c.l.b16 %v105
    %v309 = vunpack.c.l.b16 %v106
    %v310 = vunpack.c.l.b16 %v107
    %v311 = vunpack.c.l.b16 %v108
    %v312 = vunpack.c.l.b16 %v109
    %v313 = vunpack.c.l.b16 %v110
    %v314 = vunpack.c.l.b16 %v111
    %v315 = vunpack.c.l.b16 %v112
    %v316 = vunpack.c.l.b16 %v113
    %v317 = vunpack.c.l.b16 %v114
    %v318 = vunpack.c.l.b16 %v115
    %v319 = vunpack.c.l.b16 %v116
    %v320 = vunpack.c.l.b16 %v117
    %v321 = vunpack.c.l.b16 %v118
    %v322 = vunpack.c.l.b16 %v119
    %v323 = vunpack.c.l.b16 %v120
    %v324 = vunpack.c.l.b16 %v121
    %v325 = vunpack.c.l.b16 %v122
    %v326 = vunpack.c.l.b16 %v123
    %v327 = vunpack.c.l.b16 %v124
    %v328 = vunpack.c.l.b16 %v125
    %v329 = vunpack.c.l.b16 %v126
    %v330 = vunpack.c.l.b16 %v127
    %v331 = vunpack.c.l.b16 %v128
    %v332 = vunpack.c.l.b16 %v129
    %v333 = vunpack.c.l.b16 %v130
    %v334 = vunpack.c.l.b16 %v131
    %v335 = vunpack.c.l.b16 %v132
    %v336 = vunpack.c.l.b16 %v133
    %v337 = vunpack.c.l.b16 %v134
    %v338 = vunpack.c.l.b16 %v135
    %v339 = vunpack.c.l.b16 %v136
    %v340 = vunpack.c.l.b16 %v137
    %v341 = vunpack.c.l.b16 %v138
    %v342 = vunpack.c.l.b16 %v139
    %v343 = vunpack.c.l.b16 %v140
    %v344 = vunpack.c.l.b16 %v141
    %v345 = vunpack.c.l.b16 %v142
    %v346 = vunpack.c.l.b16 %v143
    %v347 = vunpack.c.l.b16 %v144
    %v348 = vunpack.c.l.b16 %v145
    %v349 = vunpack.c.l.b16 %v146
    %v350 = vunpack.c.l.b16 %v147
    %v351 = vunpack.c.l.b16 %v148
    %v352 = vunpack.c.l.b16 %v149
    %v353 = vunpack.c.l.b16 %v150
    %v354 = vunpack.c.l.b16 %v151
    %v355 = vunpack.c.l.b16 %v152
    %v356 = vunpack.c.l.b16 %v153
    %v357 = vunpack.c.l.b16 %v154
    %v358 = vunpack.c.l.b16 %v155
    %v359 = vunpack.c.l.b16 %v156
    %v360 = vunpack.c.l.b16 %v157
    %v361 = vunpack.c.l.b16 %v158
    %v362 = vunpack.c.l.b16 %v159
    %v363 = vunpack.c.l.b16 %v160
    %v364 = vunpack.c.l.b16 %v161
    %v365 = vunpack.c.l.b16 %v162
    %v366 = vunpack.c.l.b16 %v163
    %v367 = vunpack.c.l.b16 %v164
    %v368 = vunpack.c.l.b16 %v165
    %v369 = vunpack.c.l.b16 %v166
    %v370 = vunpack.c.l.b16 %v167
    %v371 = vunpack.c.l.b16 %v168
    %v372 = vunpack.c.l.b16 %v169
    %v373 = vunpack.c.l.b16 %v170
    %v374 = vunpack.c.l.b16 %v171
    %v375 = vunpack.c.l.b16 %v172
    %v376 = vunpack.c.l.b16 %v173
    %v377 = vunpack.c.l.b16 %v174
    %v378 = vunpack.c.l.b16 %v175
    %v379 = vunpack.c.l.b16 %v176
    %v380 = vunpack.c.l.b16 %v177
    %v381 = vunpack.c.l.b16 %v178
    %v382 = vunpack.c.l.b16 %v179
    %v383 = vunpack.c.l.b16 %v180
    %v384 = vunpack.c.l.b16 %v181
    %v385 = vunpack.c.l.b16 %v182
    %v386 = vunpack.c.l.b16 %v183
    %v387 = vunpack.c.l.b16 %v184
    %v388 = vunpack.c.l.b16 %v185
    %v389 = vunpack.c.l.b16 %v186
    %v390 = vunpack.c.l.b16 %v187
    %v391 = vunpack.c.l.b16 %v188
    %v392 = vunpack.c.l.b16 %v189
    %v393 = vunpack.c.l.b16 %v190
    %v394 = vunpack.c.l.b16 %v191
    %v395 = vunpack.c.l.b16 %v192
    %v396 = vunpack.c.l.b16 %v193
    %v397 = vunpack.c.l.b16 %v194
    %v398 = vunpack.c.l.b16 %v195
    %v399 = vunpack.c.l.b16 %v196
    %v400 = vunpack.c.l.b16 %v197
    %v401 = vunpack.c.l.b16 %v198
    %v402 = vunpack.c.l.b16 %v199
    %v403 = vpack.c.b16 %v306, %v305
    %v404 = vpack.c.b16 %v308, %v307
    %v405 = vpack.c.b16 %v310, %v309
    %v406 = vpack.c.b16 %v312, %v311
    %v407 = vpack.c.b16 %v314, %v313
    %v408 = vpack.c.b16 %v316, %v315
    %v409 = vpack.c.b16 %v318, %v317
    %v410 = vpack.c.b16 %v320, %v319
    %v411 = vpack.c.b16 %v322, %v321
    %v412 = vpack.c.b16 %v324, %v323
    %v413 = vpack.c.b16 %v326, %v325
    %v414 = vpack.c.b16 %v328, %v327
    %v415 = vpack.c.b16 %v330, %v329
    %v416 = vpack.c.b16 %v332, %v331
    %v417 = vpack.c.b16 %v334, %v333
    %v418 = vpack.c.b16 %v336, %v335
    %v419 = vpack.c.b16 %v338, %v337
    %v420 = vpack.c.b16 %v340, %v339
    %v421 = vpack.c.b16 %v342, %v341
    %v422 = vpack.c.b16 %v344, %v343
    %v423 = vpack.c.b16 %v346, %v345
    %v424 = vpack.c.b16 %v348, %v347
    %v425 = vpack.c.b16 %v350, %v349
    %v426 = vpack.c.b16 %v352, %v351
    %v427 = vpack.c.b16 %v354, %v353
    %v428 = vpack.c.b16 %v356, %v355
    %v429 = vpack.c.b16 %v358, %v357
    %v430 = vpack.c.b16 %v360, %v359
    %v431 = vpack.c.b16 %v362, %v361
    %v432 = vpack.c.b16 %v364, %v363
    %v433 = vpack.c.b16 %v366, %v365
    %v434 = vpack.c.b16 %v368, %v367
    %v435 = vpack.c.b16 %v370, %v369
    %v436 = vpack.c.b16 %v372, %v371
    %v437 = vpack.c.b16 %v374, %v373
    %v438 = vpack.c.b16 %v376, %v375
    %v439 = vpack.c.b16 %v378, %v377
    %v440 = vpack.c.b16 %v380, %v379
    %v441 = vpack.c.b16 %v382, %v381
    %v442 = vpack.c.b16 %v384, %v383
    %v443 = vpack.c.b16 %v386, %v385
    %v444 = vpack.c.b16 %v388, %v387
    %v445 = vpack.c.b16 %v390, %v389
    %v446 = vpack.c.b16 %v392, %v391
    %v447 = vpack.c.b16 %v394, %v393
    %v448 = vpack.c.b16 %v396, %v395
    %v449 = vpack.c.b16 %v398, %v397
    %v450 = vpack.c.b16 %v400, %v399
    %v451 = vpack.c.b16 %v402, %v401
    %vm501 = vcmask 130048
    %v503 = vsel %vm501, %v101, 0
    %505 = vmatprep.subr.bf16.mxu0 0
    %506 = vmatpush1.bf16.msra.mxu0 %v410
    %507 = vmatprep.subr.bf16.mxu0 0
    %508 = vmatpush1.bf16.msra.mxu0 %v409
    %509 = vmatprep.subr.bf16.mxu0 0
    %510 = vmatpush1.bf16.msra.mxu0 %v408
    %511 = vmatprep.subr.bf16.mxu0 0
    %512 = vmatpush1.bf16.msra.mxu0 %v407
    %513 = vmatprep.subr.bf16.mxu0 0
    %514 = vmatpush1.bf16.msra.mxu0 %v406
    %515 = vmatprep.subr.bf16.mxu0 0
    %516 = vmatpush1.bf16.msra.mxu0 %v405
    %517 = vmatprep.subr.bf16.mxu0 0
    %518 = vmatpush1.bf16.msra.mxu0 %v404
    %519 = vmatprep.subr.bf16.mxu0 0
    %520 = vmatpush1.bf16.msra.mxu0 %v403
    %521 = vmatprep.subr.bf16.mxu0 0
    %522 = vmatpush2.bf16.msra.mxu0 %v418
    %523 = vmatprep.subr.bf16.mxu0 0
    %524 = vmatpush2.bf16.msra.mxu0 %v417
    %525 = vmatprep.subr.bf16.mxu0 0
    %526 = vmatpush2.bf16.msra.mxu0 %v416
    %527 = vmatprep.subr.bf16.mxu0 0
    %528 = vmatpush2.bf16.msra.mxu0 %v415
    %529 = vmatprep.subr.bf16.mxu0 0
    %530 = vmatpush2.bf16.msra.mxu0 %v414
    %531 = vmatprep.subr.bf16.mxu0 0
    %532 = vmatpush2.bf16.msra.mxu0 %v413
    %533 = vmatprep.subr.bf16.mxu0 0
    %534 = vmatpush2.bf16.msra.mxu0 %v412
    %535 = vmatprep.subr.bf16.mxu0 0
    %536 = vmatpush2.bf16.msra.mxu0 %v411
    %537 = vmatprep.mubr.bf16.mxu0 %v96
    %538 = vmatmul.mubr.bf16.gmra.mxu0 %v95
    %v539 = vpop.f32.mrf.mxu0
    %v540 = vadd.f32 %v205, %v539
    %v541 = vpop.f32.mrf.mxu0
    %v542 = vpop.f32.mrf.mxu0
    %v543 = vpop.f32.mrf.mxu0
    %544 = vdwg.mxu0
    %545 = vmatprep.subr.bf16.mxu0 0
    %546 = vmatpush1.bf16.msra.mxu0 %v426
    %547 = vmatprep.subr.bf16.mxu0 0
    %548 = vmatpush1.bf16.msra.mxu0 %v425
    %549 = vmatprep.subr.bf16.mxu0 0
    %550 = vmatpush1.bf16.msra.mxu0 %v424
    %551 = vmatprep.subr.bf16.mxu0 0
    %552 = vmatpush1.bf16.msra.mxu0 %v423
    %553 = vmatprep.subr.bf16.mxu0 0
    %554 = vmatpush1.bf16.msra.mxu0 %v422
    %555 = vmatprep.subr.bf16.mxu0 0
    %556 = vmatpush1.bf16.msra.mxu0 %v421
    %557 = vmatprep.subr.bf16.mxu0 0
    %558 = vmatpush1.bf16.msra.mxu0 %v420
    %559 = vmatprep.subr.bf16.mxu0 0
    %560 = vmatpush1.bf16.msra.mxu0 %v419
    %561 = vmatprep.subr.bf16.mxu0 0
    %562 = vmatpush2.bf16.msra.mxu0 %v434
    %563 = vmatprep.subr.bf16.mxu0 0
    %564 = vmatpush2.bf16.msra.mxu0 %v433
    %565 = vmatprep.subr.bf16.mxu0 0
    %566 = vmatpush2.bf16.msra.mxu0 %v432
    %567 = vmatprep.subr.bf16.mxu0 0
    %568 = vmatpush2.bf16.msra.mxu0 %v431
    %569 = vmatprep.subr.bf16.mxu0 0
    %570 = vmatpush2.bf16.msra.mxu0 %v430
    %571 = vmatprep.subr.bf16.mxu0 0
    %572 = vmatpush2.bf16.msra.mxu0 %v429
    %573 = vmatprep.subr.bf16.mxu0 0
    %574 = vmatpush2.bf16.msra.mxu0 %v428
    %575 = vmatprep.subr.bf16.mxu0 0
    %576 = vmatpush2.bf16.msra.mxu0 %v427
    %577 = vmatprep.mubr.bf16.mxu0 %v98
    %578 = vmatmul.mubr.bf16.gmra.mxu0 %v97
    %v579 = vpop.f32.mrf.mxu0
    %v580 = vadd.f32 %v540, %v579
    %v581 = vpop.f32.mrf.mxu0
    %v582 = vpop.f32.mrf.mxu0
    %v583 = vpop.f32.mrf.mxu0
    %584 = vdwg.mxu0
    %585 = vmatprep.subr.bf16.mxu0 0
    %586 = vmatpush1.bf16.msra.mxu0 %v442
    %587 = vmatprep.subr.bf16.mxu0 0
    %588 = vmatpush1.bf16.msra.mxu0 %v441
    %589 = vmatprep.subr.bf16.mxu0 0
    %590 = vmatpush1.bf16.msra.mxu0 %v440
    %591 = vmatprep.subr.bf16.mxu0 0
    %592 = vmatpush1.bf16.msra.mxu0 %v439
    %593 = vmatprep.subr.bf16.mxu0 0
    %594 = vmatpush1.bf16.msra.mxu0 %v438
    %595 = vmatprep.subr.bf16.mxu0 0
    %596 = vmatpush1.bf16.msra.mxu0 %v437
    %597 = vmatprep.subr.bf16.mxu0 0
    %598 = vmatpush1.bf16.msra.mxu0 %v436
    %599 = vmatprep.subr.bf16.mxu0 0
    %600 = vmatpush1.bf16.msra.mxu0 %v435
    %601 = vmatprep.subr.bf16.mxu0 0
    %602 = vmatpush2.bf16.msra.mxu0 %v450
    %603 = vmatprep.subr.bf16.mxu0 0
    %604 = vmatpush2.bf16.msra.mxu0 %v449
    %605 = vmatprep.subr.bf16.mxu0 0
    %606 = vmatpush2.bf16.msra.mxu0 %v448
    %607 = vmatprep.subr.bf16.mxu0 0
    %608 = vmatpush2.bf16.msra.mxu0 %v447
    %609 = vmatprep.subr.bf16.mxu0 0
    %610 = vmatpush2.bf16.msra.mxu0 %v446
    %611 = vmatprep.subr.bf16.mxu0 0
    %612 = vmatpush2.bf16.msra.mxu0 %v445
    %613 = vmatprep.subr.bf16.mxu0 0
    %614 = vmatpush2.bf16.msra.mxu0 %v444
    %615 = vmatprep.subr.bf16.mxu0 0
    %616 = vmatpush2.bf16.msra.mxu0 %v443
    %617 = vmatprep.mubr.bf16.mxu0 %v100
    %618 = vmatmul.mubr.bf16.gmra.mxu0 %v99
    %v619 = vpop.f32.mrf.mxu0
    %v620 = vadd.f32 %v580, %v619
    %v621 = vpop.f32.mrf.mxu0
    %v622 = vpop.f32.mrf.mxu0
    %v623 = vpop.f32.mrf.mxu0
    %624 = vdwg.mxu0
    %625 = vmatprep.subr.bf16.mxu0 0
    %626 = vmatpush1.bf16.msra.mxu0 0
    %627 = vmatprep.subr.bf16.mxu0 0
    %628 = vmatpush1.bf16.msra.mxu0 0
    %629 = vmatprep.subr.bf16.mxu0 0
    %630 = vmatpush1.bf16.msra.mxu0 0
    %631 = vmatprep.subr.bf16.mxu0 0
    %632 = vmatpush1.bf16.msra.mxu0 0
    %633 = vmatprep.subr.bf16.mxu0 0
    %634 = vmatpush1.bf16.msra.mxu0 0
    %635 = vmatprep.subr.bf16.mxu0 0
    %636 = vmatpush1.bf16.msra.mxu0 0
    %637 = vmatprep.subr.bf16.mxu0 0
    %638 = vmatpush1.bf16.msra.mxu0 0
    %639 = vmatprep.subr.bf16.mxu0 0
    %640 = vmatpush1.bf16.msra.mxu0 %v451
    %641 = vmatprep.subr.bf16.mxu0 0
    %642 = vmatpush2.bf16.msra.mxu0 0
    %643 = vmatprep.subr.bf16.mxu0 0
    %644 = vmatpush2.bf16.msra.mxu0 0
    %645 = vmatprep.subr.bf16.mxu0 0
    %646 = vmatpush2.bf16.msra.mxu0 0
    %647 = vmatprep.subr.bf16.mxu0 0
    %648 = vmatpush2.bf16.msra.mxu0 0
    %649 = vmatprep.subr.bf16.mxu0 0
    %650 = vmatpush2.bf16.msra.mxu0 0
    %651 = vmatprep.subr.bf16.mxu0 0
    %652 = vmatpush2.bf16.msra.mxu0 0
    %653 = vmatprep.subr.bf16.mxu0 0
    %654 = vmatpush2.bf16.msra.mxu0 0
    %655 = vmatprep.subr.bf16.mxu0 0
    %656 = vmatpush2.bf16.msra.mxu0 0
    %657 = vmatprep.mubr.bf16.mxu0 0
    %658 = vmatmul.mubr.bf16.gmra.mxu0 %v503
    %v659 = vpop.f32.mrf.mxu0
    %v660 = vadd.f32 %v620, %v659
    %v661 = vpop.f32.mrf.mxu0
    %v662 = vpop.f32.mrf.mxu0
    %v663 = vpop.f32.mrf.mxu0
    %664 = vdwg.mxu0
    %v665 = vmax.f32 %v660, 0.0
    %v666 = vpack.c.bf16 %v665, %v665
    %v667 = vld [vmem:[#allocation8] sm:$0xf]
    %v668 = vld [vmem:[#allocation8 + $0x4] sm:$0xf]
    %v669 = vld [vmem:[#allocation8 + $0x8] sm:$0xf]
    %v670 = vld [vmem:[#allocation8 + $0xc] sm:$0xf]
    %v671 = vld [vmem:[#allocation8 + $0x10] sm:$0xf]
    %v672 = vld [vmem:[#allocation8 + $0x14] sm:$0xf]
    %v673 = vld [vmem:[#allocation8 + $0x18] sm:$0xf]
    %v674 = vld [vmem:[#allocation8 + $0x1c] sm:$0xf]
    %v675 = vld [vmem:[#allocation8 + $0x20] sm:$0xf]
    %v676 = vld [vmem:[#allocation8 + $0x24] sm:$0xf]
    %v677 = vld [vmem:[#allocation8 + $0x28] sm:$0xf]
    %v678 = vld [vmem:[#allocation8 + $0x2c] sm:$0xf]
    %v679 = vld [vmem:[#allocation8 + $0x30] sm:$0xf]
    %v680 = vld [vmem:[#allocation8 + $0x34] sm:$0xf]
    %v681 = vld [vmem:[#allocation8 + $0x38] sm:$0xf]
    %v682 = vld [vmem:[#allocation8 + $0x3c] sm:$0xf]
    %v683 = vld [vmem:[%s4] sm:$0x1]
    %v685 = vlaneseq
    %v686 = vshrl.u32 %v685, 7
    %v687 = vsub.s32 0, %v686
    %v688 = vrot.slane %v683, %v687
    %v706 = vunpack.c.l.b16 %v667
    %v707 = vunpack.c.l.b16 %v668
    %v708 = vunpack.c.l.b16 %v669
    %v709 = vunpack.c.l.b16 %v670
    %v710 = vunpack.c.l.b16 %v671
    %v711 = vunpack.c.l.b16 %v672
    %v712 = vunpack.c.l.b16 %v673
    %v713 = vunpack.c.l.b16 %v674
    %v714 = vunpack.c.l.b16 %v675
    %v715 = vunpack.c.l.b16 %v676
    %v716 = vunpack.c.l.b16 %v677
    %v717 = vunpack.c.l.b16 %v678
    %v718 = vunpack.c.l.b16 %v679
    %v719 = vunpack.c.l.b16 %v680
    %v720 = vunpack.c.l.b16 %v681
    %v721 = vunpack.c.l.b16 %v682
    %v722 = vpack.c.b16 %v707, %v706
    %v723 = vpack.c.b16 %v709, %v708
    %v724 = vpack.c.b16 %v711, %v710
    %v725 = vpack.c.b16 %v713, %v712
    %v726 = vpack.c.b16 %v715, %v714
    %v727 = vpack.c.b16 %v717, %v716
    %v728 = vpack.c.b16 %v719, %v718
    %v729 = vpack.c.b16 %v721, %v720
    %738 = vmatprep.subr.bf16.mxu0 0
    %739 = vmatpush1.bf16.msra.mxu0 %v729
    %740 = vmatprep.subr.bf16.mxu0 0
    %741 = vmatpush1.bf16.msra.mxu0 %v728
    %742 = vmatprep.subr.bf16.mxu0 0
    %743 = vmatpush1.bf16.msra.mxu0 %v727
    %744 = vmatprep.subr.bf16.mxu0 0
    %745 = vmatpush1.bf16.msra.mxu0 %v726
    %746 = vmatprep.subr.bf16.mxu0 0
    %747 = vmatpush1.bf16.msra.mxu0 %v725
    %748 = vmatprep.subr.bf16.mxu0 0
    %749 = vmatpush1.bf16.msra.mxu0 %v724
    %750 = vmatprep.subr.bf16.mxu0 0
    %751 = vmatpush1.bf16.msra.mxu0 %v723
    %752 = vmatprep.subr.bf16.mxu0 0
    %753 = vmatpush1.bf16.msra.mxu0 %v722
    %754 = vmatprep.subr.bf16.mxu0 0
    %755 = vmatpush2.bf16.msra.mxu0 0
    %756 = vmatprep.subr.bf16.mxu0 0
    %757 = vmatpush2.bf16.msra.mxu0 0
    %758 = vmatprep.subr.bf16.mxu0 0
    %759 = vmatpush2.bf16.msra.mxu0 0
    %760 = vmatprep.subr.bf16.mxu0 0
    %761 = vmatpush2.bf16.msra.mxu0 0
    %762 = vmatprep.subr.bf16.mxu0 0
    %763 = vmatpush2.bf16.msra.mxu0 0
    %764 = vmatprep.subr.bf16.mxu0 0
    %765 = vmatpush2.bf16.msra.mxu0 0
    %766 = vmatprep.subr.bf16.mxu0 0
    %767 = vmatpush2.bf16.msra.mxu0 0
    %768 = vmatprep.subr.bf16.mxu0 0
    %769 = vmatpush2.bf16.msra.mxu0 0
    %770 = vmatprep.mubr.bf16.mxu0 0
    %771 = vmatmul.mubr.bf16.gmra.mxu0 %v666
    %v772 = vpop.f32.mrf.mxu0
    %v773 = vadd.f32 %v688, %v772
    %v774 = vpop.f32.mrf.mxu0
    %v775 = vpop.f32.mrf.mxu0
    %v776 = vpop.f32.mrf.mxu0
    %777 = vdwg.mxu0
    %v778 = vmax.f32 %v773, 0.0
    %v779 = vpack.c.bf16 %v778, %v778
    %v780 = vld [vmem:[#allocation9] sm:$0xf]
    %v781 = vld [vmem:[#allocation9 + $0x4] sm:$0xf]
    %v782 = vld [vmem:[#allocation9 + $0x8] sm:$0xf]
    %v783 = vld [vmem:[#allocation9 + $0xc] sm:$0xf]
    %v784 = vld [vmem:[#allocation9 + $0x10] sm:$0xf]
    %v785 = vld [vmem:[#allocation9 + $0x14] sm:$0xf]
    %v786 = vld [vmem:[#allocation9 + $0x18] sm:$0xf]
    %v787 = vld [vmem:[#allocation9 + $0x1c] sm:$0xf]
    %v788 = vld [vmem:[#allocation9 + $0x20] sm:$0xf]
    %v789 = vld [vmem:[#allocation9 + $0x24] sm:$0xf]
    %v790 = vld [vmem:[#allocation9 + $0x28] sm:$0xf]
    %v791 = vld [vmem:[#allocation9 + $0x2c] sm:$0xf]
    %v792 = vld [vmem:[#allocation9 + $0x30] sm:$0xf]
    %v793 = vld [vmem:[#allocation9 + $0x34] sm:$0xf]
    %v794 = vld [vmem:[#allocation9 + $0x38] sm:$0xf]
    %v795 = vld [vmem:[#allocation9 + $0x3c] sm:$0xf]
    %v796 = vld [vmem:[%s6] sm:$0x1]
    %v798 = vlaneseq
    %v799 = vshrl.u32 %v798, 7
    %v800 = vsub.s32 0, %v799
    %v801 = vrot.slane %v796, %v800
    %v819 = vunpack.c.l.b16 %v780
    %v820 = vunpack.c.l.b16 %v781
    %v821 = vunpack.c.l.b16 %v782
    %v822 = vunpack.c.l.b16 %v783
    %v823 = vunpack.c.l.b16 %v784
    %v824 = vunpack.c.l.b16 %v785
    %v825 = vunpack.c.l.b16 %v786
    %v826 = vunpack.c.l.b16 %v787
    %v827 = vunpack.c.l.b16 %v788
    %v828 = vunpack.c.l.b16 %v789
    %v829 = vunpack.c.l.b16 %v790
    %v830 = vunpack.c.l.b16 %v791
    %v831 = vunpack.c.l.b16 %v792
    %v832 = vunpack.c.l.b16 %v793
    %v833 = vunpack.c.l.b16 %v794
    %v834 = vunpack.c.l.b16 %v795
    %v835 = vpack.c.b16 %v820, %v819
    %v836 = vpack.c.b16 %v822, %v821
    %v837 = vpack.c.b16 %v824, %v823
    %v838 = vpack.c.b16 %v826, %v825
    %v839 = vpack.c.b16 %v828, %v827
    %v840 = vpack.c.b16 %v830, %v829
    %v841 = vpack.c.b16 %v832, %v831
    %v842 = vpack.c.b16 %v834, %v833
    %851 = vmatprep.subr.bf16.mxu0 0
    %852 = vmatpush1.bf16.msra.mxu0 %v842
    %853 = vmatprep.subr.bf16.mxu0 0
    %854 = vmatpush1.bf16.msra.mxu0 %v841
    %855 = vmatprep.subr.bf16.mxu0 0
    %856 = vmatpush1.bf16.msra.mxu0 %v840
    %857 = vmatprep.subr.bf16.mxu0 0
    %858 = vmatpush1.bf16.msra.mxu0 %v839
    %859 = vmatprep.subr.bf16.mxu0 0
    %860 = vmatpush1.bf16.msra.mxu0 %v838
    %861 = vmatprep.subr.bf16.mxu0 0
    %862 = vmatpush1.bf16.msra.mxu0 %v837
    %863 = vmatprep.subr.bf16.mxu0 0
    %864 = vmatpush1.bf16.msra.mxu0 %v836
    %865 = vmatprep.subr.bf16.mxu0 0
    %866 = vmatpush1.bf16.msra.mxu0 %v835
    %867 = vmatprep.subr.bf16.mxu0 0
    %868 = vmatpush2.bf16.msra.mxu0 0
    %869 = vmatprep.subr.bf16.mxu0 0
    %870 = vmatpush2.bf16.msra.mxu0 0
    %871 = vmatprep.subr.bf16.mxu0 0
    %872 = vmatpush2.bf16.msra.mxu0 0
    %873 = vmatprep.subr.bf16.mxu0 0
    %874 = vmatpush2.bf16.msra.mxu0 0
    %875 = vmatprep.subr.bf16.mxu0 0
    %876 = vmatpush2.bf16.msra.mxu0 0
    %877 = vmatprep.subr.bf16.mxu0 0
    %878 = vmatpush2.bf16.msra.mxu0 0
    %879 = vmatprep.subr.bf16.mxu0 0
    %880 = vmatpush2.bf16.msra.mxu0 0
    %881 = vmatprep.subr.bf16.mxu0 0
    %882 = vmatpush2.bf16.msra.mxu0 0
    %883 = vmatprep.mubr.bf16.mxu0 0
    %884 = vmatmul.mubr.bf16.gmra.mxu0 %v779
    %v885 = vpop.f32.mrf.mxu0
    %v886 = vadd.f32 %v801, %v885
    %v887 = vpop.f32.mrf.mxu0
    %v888 = vpop.f32.mrf.mxu0
    %v889 = vpop.f32.mrf.mxu0
    %890 = vdwg.mxu0
    %v891 = vmax.f32 %v886, 0.0
    %v892 = vld [vmem:[%s7] sm:$0x1]
    %v893 = vpack.c.bf16 %v891, %v891
    %s894 = sld [smem:[#allocation2]]
    %v895 = vstv %s894
    %896 = vmatprep.subr.bf16.mxu0 0
    %897 = vmatpush1.bf16.xpose.msra.mxu0 0
    %898 = vmatprep.subr.bf16.mxu0 0
    %899 = vmatpush1.bf16.xpose.msra.mxu0 0
    %900 = vmatprep.subr.bf16.mxu0 0
    %901 = vmatpush1.bf16.xpose.msra.mxu0 0
    %902 = vmatprep.subr.bf16.mxu0 0
    %903 = vmatpush1.bf16.xpose.msra.mxu0 0
    %904 = vmatprep.subr.bf16.mxu0 0
    %905 = vmatpush1.bf16.xpose.msra.mxu0 0
    %906 = vmatprep.subr.bf16.mxu0 0
    %907 = vmatpush1.bf16.xpose.msra.mxu0 0
    %908 = vmatprep.subr.bf16.mxu0 0
    %909 = vmatpush1.bf16.xpose.msra.mxu0 0
    %910 = vmatprep.subr.bf16.mxu0 0
    %911 = vmatpush1.bf16.xpose.msra.mxu0 %v893
    %912 = vmatprep.subr.bf16.mxu0 0
    %913 = vmatpush2.bf16.xpose.msra.mxu0 0
    %914 = vmatprep.subr.bf16.mxu0 0
    %915 = vmatpush2.bf16.xpose.msra.mxu0 0
    %916 = vmatprep.subr.bf16.mxu0 0
    %917 = vmatpush2.bf16.xpose.msra.mxu0 0
    %918 = vmatprep.subr.bf16.mxu0 0
    %919 = vmatpush2.bf16.xpose.msra.mxu0 0
    %920 = vmatprep.subr.bf16.mxu0 0
    %921 = vmatpush2.bf16.xpose.msra.mxu0 0
    %922 = vmatprep.subr.bf16.mxu0 0
    %923 = vmatpush2.bf16.xpose.msra.mxu0 0
    %924 = vmatprep.subr.bf16.mxu0 0
    %925 = vmatpush2.bf16.xpose.msra.mxu0 0
    %926 = vmatprep.subr.bf16.mxu0 0
    %927 = vmatpush2.bf16.xpose.msra.mxu0 0
    %928 = vmatprep.mubr.bf16.mxu0 0
    %929 = vmatmul.mubr.bf16.gmra.mxu0 %v892
    %v930 = vpop.f32.mrf.mxu0
    %v931 = vadd.f32 %v895, %v930
    %v932 = vpop.f32.mrf.mxu0
    %v933 = vpop.f32.mrf.mxu0
    %v934 = vpop.f32.mrf.mxu0
    %935 = vdwg.mxu0
    %v936 = vsub.f32 0.0, %v931
    %v937 = vmul.f32 %v936, 1.442695
    %v938 = vpow.pop %v937
    %v939 = vadd.f32 %v938, 1.0
    %v940 = vrcp.pop %v939
    %v941 = vmul.f32 1.0, %v940
    %vm942 = vcmask 57344
    %943 = vst.msk [vmem:[#allocation11] sm:$0x1] %vm942, %v941
    // Predicated region
    $region54: #{tpu_custom_call.1} parent=1 // pred_check
      _
    $region55: #{tpu_custom_call.1} parent=1 // pred_check_branch
      %945 = sbr.rel (0) target = $region57
    $region56: #{tpu_custom_call.1} parent=1 // pred_region
      %s947 = ssub.s32 16, 16
      %948 = vsyncadd [#allocation5], %s947
      %s950 = sshll.u32 [#allocation11], 4
      %s951 = int_to_ptr.vmem [resolvable:$true] %s950
      %953 = dma.vmem_to_hbm [thread:$0]  %s951, 16, %s9, [#allocation5]
    $region57: #{tpu_custom_call.1} parent=1 // pred_fallthru
      _
    // Predicated region
    $region58: #{tpu_custom_call.1} parent=1 // pred_check
      _
    $region59: #{tpu_custom_call.1} parent=1 // pred_check_branch
      %955 = sbr.rel (0) target = $region61
    $region60: #{tpu_custom_call.1} parent=1 // pred_region
      %956 = dma.done [#allocation5], 16
    $region61: #{tpu_custom_call.1} parent=1 // pred_fallthru
      _
    %957 = vsyncpa [#allocation4], 1
    %958 = vsyncpa [#allocation7], 1
    %959 = vsyncpa [#allocation10], 1
    %960 = vsyncpa [#allocation5], 1

</llo_original>
